<compile_context>
chip_gen: v7x
topology: tpu7x:2x2x1
jax: 0.10.0
libtpu: 0.0.40
codegen_flags: <defaults>
</compile_context>

<pallas_src>
import functools
import math

import jax
import jax.numpy as jnp
from jax import lax
from jax.experimental import pallas as pl
from jax.experimental.pallas import tpu as pltpu


def _mha_fused_kernel(*refs, B, Sq, Sk, H, has_mask):
    """Single invocation: all batches and heads fused in-kernel.

    Shapes (all whole arrays, resident in VMEM):
      q_ref    : (B*Sq, Din)             k_ref   : (B*Sk, Din)
      wq_ref   : (Din, H*Dp)  (scale folded, head blocks lane-padded to Dp=128)
      bq_ref   : (1, H*Dp)
      wkv_ref  : (Din, 2*H*Dp) = [Wk_pad | Wv_pad]     bkv_ref : (1, 2*H*Dp)
      wout_ref : (H*Dp, D) (zero rows on the pad)      bout_ref: (1, D)
      mask_ref : (Bm, Sq, Sk) f32 0/1 (only if has_mask)
      o_ref    : (B, Sq, D)
    """
    if has_mask:
        (q_ref, k_ref, wq_ref, bq_ref, wkv_ref, bkv_ref,
         wout_ref, bout_ref, mask_ref, o_ref) = refs
    else:
        (q_ref, k_ref, wq_ref, bq_ref, wkv_ref, bkv_ref,
         wout_ref, bout_ref, o_ref) = refs
        mask_ref = None

    HDp = wq_ref.shape[1]
    Dp = HDp // H

    wq = wq_ref[...]
    bq = bq_ref[...]
    wkv = wkv_ref[...]
    bkv = bkv_ref[...]
    wout = wout_ref[...]
    bout = bout_ref[...]

    # Batched projections over all (batch, position) rows at once: one MXU pass
    # each for Q and for fused K/V (lane-dense N = H*Dp and 2*H*Dp).
    pq_all = jnp.dot(q_ref[...], wq, preferred_element_type=jnp.float32) + bq     # (B*Sq, H*Dp)
    pkv_all = jnp.dot(k_ref[...], wkv, preferred_element_type=jnp.float32) + bkv  # (B*Sk, 2*H*Dp)

    for b in range(B):                       # static, fully unrolled (tiny B)
        pq = pq_all[b * Sq:(b + 1) * Sq, :]      # (Sq, H*Dp)  sublane-aligned slice
        pkv = pkv_all[b * Sk:(b + 1) * Sk, :]    # (Sk, 2*H*Dp)

        if has_mask:
            m = mask_ref[b] if mask_ref.shape[0] > 1 else mask_ref[0]   # (Sq, Sk)

        ctxs = []
        for h in range(H):                   # static, fully unrolled (tiny H)
            pq_h = pq[:, h * Dp:(h + 1) * Dp]                  # (Sq, Dp) lane-aligned
            pk_h = pkv[:, h * Dp:(h + 1) * Dp]                 # (Sk, Dp)
            v_h = pkv[:, HDp + h * Dp:HDp + (h + 1) * Dp]      # (Sk, Dp)

            # scores = pq_h @ pk_h^T  (contract last dims; no explicit transpose)
            scores = lax.dot_general(
                pq_h, pk_h, (((1,), (1,)), ((), ())),
                preferred_element_type=jnp.float32)            # (Sq, Sk)
            if has_mask:
                scores = jnp.where(m > 0, scores, -1e9)        # masked_fill(mask==0,-1e9)

            # numerically stable softmax over the key axis (exact normalization)
            scores = scores - jnp.max(scores, axis=-1, keepdims=True)
            p = jnp.exp(scores)
            alphas = p / jnp.sum(p, axis=-1, keepdims=True)

            ctxs.append(jnp.dot(alphas, v_h,
                                preferred_element_type=jnp.float32))   # (Sq, Dp)

        # Fused output projection: one (Sq, H*Dp) @ (H*Dp, D) MXU pass.
        ctx = jnp.concatenate(ctxs, axis=-1)                    # (Sq, H*Dp)
        out_b = jnp.dot(ctx, wout, preferred_element_type=jnp.float32) + bout
        o_ref[b] = out_b.astype(o_ref.dtype)


def multi_head_attention(query, keys, packed_params, n_heads, mask=None):
    """Pallas implementation of MultiHeadAttention.forward (mask optional)."""
    wq_p, bq_p, wkv_p, bkv_p, wout_p, bout_p = packed_params
    B, Sq, Din = query.shape
    _, Sk, _ = keys.shape
    D = wout_p.shape[-1]

    # Flatten batch into rows so the projections are a single matmul each.
    q2d = query.reshape(B * Sq, Din)
    k2d = keys.reshape(B * Sk, Din)

    has_mask = mask is not None
    inputs = [q2d, k2d, wq_p, bq_p, wkv_p, bkv_p, wout_p, bout_p]
    if has_mask:
        inputs.append(mask.astype(jnp.float32))      # (Bm, Sq, Sk) 0/1

    vmem = pl.BlockSpec(memory_space=pltpu.MemorySpace.VMEM)
    kernel = functools.partial(_mha_fused_kernel, B=B, Sq=Sq, Sk=Sk,
                               H=n_heads, has_mask=has_mask)
    # TODO(synk): at production sizes, add a ("parallel", ...) grid over B / Sq
    # tiles (needed for v7x's two TensorCores and its 64 MiB VMEM budget).
    return pl.pallas_call(
        kernel,
        out_shape=jax.ShapeDtypeStruct((B, Sq, D), query.dtype),
        in_specs=[vmem] * len(inputs),
        out_specs=vmem,
    )(*inputs)


def pack_params(params, lane_pad=128):
    """Pack per-head params into lane-aligned 2-D matrices; fold 1/sqrt(d_k).

    Each head's D-wide block is zero-padded to Dp (a multiple of 128 lanes) so
    in-kernel head slices are vreg/tile-aligned.  Zero pad columns/rows make
    every padded contraction contribute exactly 0.
    """
    wq, bq, wk, bk, wv, bv, wout, bout = params
    H, Din, D = wq.shape
    scale = 1.0 / math.sqrt(D)
    Dp = ((D + lane_pad - 1) // lane_pad) * lane_pad

    def w2d(w):  # (H, Din, D) -> (Din, H*Dp), head-blocked & lane-padded
        wp = jnp.pad(w, ((0, 0), (0, 0), (0, Dp - D)))
        return jnp.transpose(wp, (1, 0, 2)).reshape(Din, H * Dp)

    def b2d(b):  # (H, 1, D) -> (1, H*Dp)
        bp = jnp.pad(b, ((0, 0), (0, 0), (0, Dp - D)))
        return jnp.transpose(bp, (1, 0, 2)).reshape(1, H * Dp)

    wq_p = w2d(wq) * scale
    bq_p = b2d(bq) * scale
    wkv_p = jnp.concatenate([w2d(wk), w2d(wv)], axis=-1)      # (Din, 2*H*Dp)
    bkv_p = jnp.concatenate([b2d(bk), b2d(bv)], axis=-1)      # (1, 2*H*Dp)
    wout_p = jnp.pad(wout, ((0, 0), (0, Dp - D), (0, 0))).reshape(H * Dp, D)
    bout_p = bout.reshape(1, D)
    return (wq_p, bq_p, wkv_p, bkv_p, wout_p, bout_p)


def subsequent_mask(size):
    """(1, size, size) lower-triangular bool mask (== module's subsequent_mask)."""
    return jnp.tril(jnp.ones((1, size, size), dtype=bool))


def reference(query, keys, params, mask=None):
    """Pure-JAX reference mirroring the PyTorch module exactly."""
    wq, bq, wk, bk, wv, bv, wout, bout = params
    H, _, D = wq.shape
    ctxs = []
    for h in range(H):
        pq = query @ wq[h] + bq[h]          # (B, Sq, D)
        pk = keys @ wk[h] + bk[h]           # (B, Sk, D)
        v = keys @ wv[h] + bv[h]            # (B, Sk, D)  (proj_values=True)
        scores = jnp.einsum("bqd,bkd->bqk", pq, pk) / math.sqrt(D)
        if mask is not None:
            scores = jnp.where(mask, scores, -1e9)
        alphas = jax.nn.softmax(scores, axis=-1)
        ctxs.append(jnp.einsum("bqk,bkd->bqd", alphas, v))
    concat = jnp.concatenate(ctxs, axis=-1)                 # (B, Sq, H*D)
    return concat @ wout.reshape(H * D, D) + bout.reshape(D)


def init_params(key, n_heads, d_model, input_dim):
    """Deterministic parameter init (uniform, like nn.Linear defaults)."""
    ks = jax.random.split(key, 8)
    lim_in = 1.0 / math.sqrt(input_dim)
    lim_out = 1.0 / math.sqrt(n_heads * d_model)
    u = jax.random.uniform
    wq = u(ks[0], (n_heads, input_dim, d_model), jnp.float32, -lim_in, lim_in)
    bq = u(ks[1], (n_heads, 1, d_model), jnp.float32, -lim_in, lim_in)
    wk = u(ks[2], (n_heads, input_dim, d_model), jnp.float32, -lim_in, lim_in)
    bk = u(ks[3], (n_heads, 1, d_model), jnp.float32, -lim_in, lim_in)
    wv = u(ks[4], (n_heads, input_dim, d_model), jnp.float32, -lim_in, lim_in)
    bv = u(ks[5], (n_heads, 1, d_model), jnp.float32, -lim_in, lim_in)
    wout = u(ks[6], (n_heads, d_model, d_model), jnp.float32, -lim_out, lim_out)
    bout = u(ks[7], (1, 1, d_model), jnp.float32, -lim_out, lim_out)
    return (wq, bq, wk, bk, wv, bv, wout, bout)


if __name__ == "__main__":
    # Small shapes consistent with the module: n_heads=2, d_model=32,
    # input_dim=16, batch=2, seq=8.
    n_heads, d_model, input_dim = 2, 32, 16
    B, Sq, Sk = 2, 8, 8

    key = jax.random.PRNGKey(0)
    k_params, k_q, k_k, k_t = jax.random.split(key, 4)

    params = init_params(k_params, n_heads, d_model, input_dim)
    packed = pack_params(params)

    query = jax.random.normal(k_q, (B, Sq, input_dim), jnp.float32)
    keys = jax.random.normal(k_k, (B, Sk, input_dim), jnp.float32)

    # 1) cross-attention, mask=None (decoder attending to encoder states)
    out = multi_head_attention(query, keys, packed, n_heads)
    out = jax.block_until_ready(out)
    ref = reference(query, keys, params)
    assert out.shape == (B, Sq, d_model), out.shape
    assert jnp.allclose(out, ref, rtol=1e-3, atol=1e-3), (
        float(jnp.max(jnp.abs(out - ref))))

    # 2) masked self-attention with the module's subsequent (causal) mask
    tgt = jax.random.normal(k_t, (B, Sq, input_dim), jnp.float32)
    mask = subsequent_mask(Sq)                        # (1, Sq, Sq) bool
    out_m = multi_head_attention(tgt, tgt, packed, n_heads, mask=mask)
    out_m = jax.block_until_ready(out_m)
    ref_m = reference(tgt, tgt, params, mask=mask)
    assert jnp.allclose(out_m, ref_m, rtol=1e-3, atol=1e-3), (
        float(jnp.max(jnp.abs(out_m - ref_m))))

    print("KERNEL_OK")
</pallas_src>

<mosaic_0001>
module attributes {stable_mosaic.version = 11 : i64} {
  func.func @_mha_fused_kernel(%arg0: memref<16x16xf32, #tpu.memory_space<vmem>>, %arg1: memref<16x16xf32, #tpu.memory_space<vmem>>, %arg2: memref<16x256xf32, #tpu.memory_space<vmem>>, %arg3: memref<1x256xf32, #tpu.memory_space<vmem>>, %arg4: memref<16x512xf32, #tpu.memory_space<vmem>>, %arg5: memref<1x512xf32, #tpu.memory_space<vmem>>, %arg6: memref<256x32xf32, #tpu.memory_space<vmem>>, %arg7: memref<1x32xf32, #tpu.memory_space<vmem>>, %arg8: memref<2x8x32xf32, #tpu.memory_space<vmem>>) attributes {dimension_semantics = [], scalar_prefetch = 0 : i64, scratch_operands = 0 : i64, tpu.core_type = #tpu.core_type<tc>} {
    %c0 = arith.constant 0 : index
    %c0_0 = arith.constant 0 : index
    %0 = vector.load %arg2[%c0, %c0_0] : memref<16x256xf32, #tpu.memory_space<vmem>>, vector<16x256xf32>
    %c0_1 = arith.constant 0 : index
    %c0_2 = arith.constant 0 : index
    %1 = vector.load %arg3[%c0_1, %c0_2] : memref<1x256xf32, #tpu.memory_space<vmem>>, vector<1x256xf32>
    %c0_3 = arith.constant 0 : index
    %c0_4 = arith.constant 0 : index
    %2 = vector.load %arg4[%c0_3, %c0_4] : memref<16x512xf32, #tpu.memory_space<vmem>>, vector<16x512xf32>
    %c0_5 = arith.constant 0 : index
    %c0_6 = arith.constant 0 : index
    %3 = vector.load %arg5[%c0_5, %c0_6] : memref<1x512xf32, #tpu.memory_space<vmem>>, vector<1x512xf32>
    %c0_7 = arith.constant 0 : index
    %c0_8 = arith.constant 0 : index
    %4 = vector.load %arg6[%c0_7, %c0_8] : memref<256x32xf32, #tpu.memory_space<vmem>>, vector<256x32xf32>
    %c0_9 = arith.constant 0 : index
    %c0_10 = arith.constant 0 : index
    %5 = vector.load %arg7[%c0_9, %c0_10] : memref<1x32xf32, #tpu.memory_space<vmem>>, vector<1x32xf32>
    %c0_11 = arith.constant 0 : index
    %c0_12 = arith.constant 0 : index
    %6 = vector.load %arg0[%c0_11, %c0_12] : memref<16x16xf32, #tpu.memory_space<vmem>>, vector<16x16xf32>
    %cst = arith.constant dense<0.000000e+00> : vector<16x256xf32>
    %7 = tpu.matmul %6, %0, %cst {dimension_numbers = #tpu.dot_dimension_numbers<[1], [0], [0], [1], [0, 0, 1, 1], [], []>} : vector<16x16xf32>, vector<16x256xf32>, vector<16x256xf32> -> vector<16x256xf32>
    %8 = vector.broadcast %1 : vector<1x256xf32> to vector<16x256xf32>
    %9 = arith.addf %7, %8 : vector<16x256xf32>
    %c0_13 = arith.constant 0 : index
    %c0_14 = arith.constant 0 : index
    %10 = vector.load %arg1[%c0_13, %c0_14] : memref<16x16xf32, #tpu.memory_space<vmem>>, vector<16x16xf32>
    %cst_15 = arith.constant dense<0.000000e+00> : vector<16x512xf32>
    %11 = tpu.matmul %10, %2, %cst_15 {dimension_numbers = #tpu.dot_dimension_numbers<[1], [0], [0], [1], [0, 0, 1, 1], [], []>} : vector<16x16xf32>, vector<16x512xf32>, vector<16x512xf32> -> vector<16x512xf32>
    %12 = vector.broadcast %3 : vector<1x512xf32> to vector<16x512xf32>
    %13 = arith.addf %11, %12 : vector<16x512xf32>
    %14 = vector.extract_strided_slice %9 {offsets = [0, 0], sizes = [8, 256], strides = [1, 1]} : vector<16x256xf32> to vector<8x256xf32>
    %15 = vector.extract_strided_slice %13 {offsets = [0, 0], sizes = [8, 512], strides = [1, 1]} : vector<16x512xf32> to vector<8x512xf32>
    %16 = vector.extract_strided_slice %14 {offsets = [0, 0], sizes = [8, 128], strides = [1, 1]} : vector<8x256xf32> to vector<8x128xf32>
    %17 = vector.extract_strided_slice %15 {offsets = [0, 0], sizes = [8, 128], strides = [1, 1]} : vector<8x512xf32> to vector<8x128xf32>
    %18 = vector.extract_strided_slice %15 {offsets = [0, 256], sizes = [8, 128], strides = [1, 1]} : vector<8x512xf32> to vector<8x128xf32>
    %cst_16 = arith.constant dense<0.000000e+00> : vector<8x8xf32>
    %19 = tpu.matmul %16, %17, %cst_16 {dimension_numbers = #tpu.dot_dimension_numbers<[1], [1], [0], [0], [0, 0, 1, 0], [], []>} : vector<8x128xf32>, vector<8x128xf32>, vector<8x8xf32> -> vector<8x8xf32>
    %cst_17 = arith.constant dense<0xFF800000> : vector<8xf32>
    %20 = vector.multi_reduction <maximumf>, %19, %cst_17 [1] : vector<8x8xf32> to vector<8xf32>
    %21 = vector.shape_cast %20 : vector<8xf32> to vector<8x1xf32>
    %22 = vector.broadcast %21 : vector<8x1xf32> to vector<8x8xf32>
    %23 = arith.subf %19, %22 : vector<8x8xf32>
    %24 = math.exp %23 : vector<8x8xf32>
    %cst_18 = arith.constant dense<0.000000e+00> : vector<8xf32>
    %25 = vector.multi_reduction <add>, %24, %cst_18 [1] : vector<8x8xf32> to vector<8xf32>
    %26 = vector.shape_cast %25 : vector<8xf32> to vector<8x1xf32>
    %27 = vector.broadcast %26 : vector<8x1xf32> to vector<8x8xf32>
    %28 = arith.divf %24, %27 : vector<8x8xf32>
    %cst_19 = arith.constant dense<0.000000e+00> : vector<8x128xf32>
    %29 = tpu.matmul %28, %18, %cst_19 {dimension_numbers = #tpu.dot_dimension_numbers<[1], [0], [0], [1], [0, 0, 1, 1], [], []>} : vector<8x8xf32>, vector<8x128xf32>, vector<8x128xf32> -> vector<8x128xf32>
    %30 = vector.extract_strided_slice %14 {offsets = [0, 128], sizes = [8, 128], strides = [1, 1]} : vector<8x256xf32> to vector<8x128xf32>
    %31 = vector.extract_strided_slice %15 {offsets = [0, 128], sizes = [8, 128], strides = [1, 1]} : vector<8x512xf32> to vector<8x128xf32>
    %32 = vector.extract_strided_slice %15 {offsets = [0, 384], sizes = [8, 128], strides = [1, 1]} : vector<8x512xf32> to vector<8x128xf32>
    %cst_20 = arith.constant dense<0.000000e+00> : vector<8x8xf32>
    %33 = tpu.matmul %30, %31, %cst_20 {dimension_numbers = #tpu.dot_dimension_numbers<[1], [1], [0], [0], [0, 0, 1, 0], [], []>} : vector<8x128xf32>, vector<8x128xf32>, vector<8x8xf32> -> vector<8x8xf32>
    %cst_21 = arith.constant dense<0xFF800000> : vector<8xf32>
    %34 = vector.multi_reduction <maximumf>, %33, %cst_21 [1] : vector<8x8xf32> to vector<8xf32>
    %35 = vector.shape_cast %34 : vector<8xf32> to vector<8x1xf32>
    %36 = vector.broadcast %35 : vector<8x1xf32> to vector<8x8xf32>
    %37 = arith.subf %33, %36 : vector<8x8xf32>
    %38 = math.exp %37 : vector<8x8xf32>
    %cst_22 = arith.constant dense<0.000000e+00> : vector<8xf32>
    %39 = vector.multi_reduction <add>, %38, %cst_22 [1] : vector<8x8xf32> to vector<8xf32>
    %40 = vector.shape_cast %39 : vector<8xf32> to vector<8x1xf32>
    %41 = vector.broadcast %40 : vector<8x1xf32> to vector<8x8xf32>
    %42 = arith.divf %38, %41 : vector<8x8xf32>
    %cst_23 = arith.constant dense<0.000000e+00> : vector<8x128xf32>
    %43 = tpu.matmul %42, %32, %cst_23 {dimension_numbers = #tpu.dot_dimension_numbers<[1], [0], [0], [1], [0, 0, 1, 1], [], []>} : vector<8x8xf32>, vector<8x128xf32>, vector<8x128xf32> -> vector<8x128xf32>
    %44 = tpu.concatenate %29, %43 in 1 : vector<8x128xf32>, vector<8x128xf32> -> vector<8x256xf32>
    %cst_24 = arith.constant dense<0.000000e+00> : vector<8x32xf32>
    %45 = tpu.matmul %44, %4, %cst_24 {dimension_numbers = #tpu.dot_dimension_numbers<[1], [0], [0], [1], [0, 0, 1, 1], [], []>} : vector<8x256xf32>, vector<256x32xf32>, vector<8x32xf32> -> vector<8x32xf32>
    %46 = vector.broadcast %5 : vector<1x32xf32> to vector<8x32xf32>
    %47 = arith.addf %45, %46 : vector<8x32xf32>
    %c0_25 = arith.constant 0 : index
    %c0_26 = arith.constant 0 : index
    %c0_27 = arith.constant 0 : index
    %48 = vector.load %arg8[%c0_25, %c0_26, %c0_27] : memref<2x8x32xf32, #tpu.memory_space<vmem>>, vector<1x8x32xf32>
    %49 = vector.shape_cast %48 : vector<1x8x32xf32> to vector<8x32xf32>
    %50 = vector.shape_cast %47 : vector<8x32xf32> to vector<1x8x32xf32>
    tpu.vector_store %arg8[%c0_25, %c0_26, %c0_27], %50 {strides = array<i32>} : memref<2x8x32xf32, #tpu.memory_space<vmem>>, vector<1x8x32xf32>,
    %51 = vector.extract_strided_slice %9 {offsets = [8, 0], sizes = [8, 256], strides = [1, 1]} : vector<16x256xf32> to vector<8x256xf32>
    %52 = vector.extract_strided_slice %13 {offsets = [8, 0], sizes = [8, 512], strides = [1, 1]} : vector<16x512xf32> to vector<8x512xf32>
    %53 = vector.extract_strided_slice %51 {offsets = [0, 0], sizes = [8, 128], strides = [1, 1]} : vector<8x256xf32> to vector<8x128xf32>
    %54 = vector.extract_strided_slice %52 {offsets = [0, 0], sizes = [8, 128], strides = [1, 1]} : vector<8x512xf32> to vector<8x128xf32>
    %55 = vector.extract_strided_slice %52 {offsets = [0, 256], sizes = [8, 128], strides = [1, 1]} : vector<8x512xf32> to vector<8x128xf32>
    %cst_28 = arith.constant dense<0.000000e+00> : vector<8x8xf32>
    %56 = tpu.matmul %53, %54, %cst_28 {dimension_numbers = #tpu.dot_dimension_numbers<[1], [1], [0], [0], [0, 0, 1, 0], [], []>} : vector<8x128xf32>, vector<8x128xf32>, vector<8x8xf32> -> vector<8x8xf32>
    %cst_29 = arith.constant dense<0xFF800000> : vector<8xf32>
    %57 = vector.multi_reduction <maximumf>, %56, %cst_29 [1] : vector<8x8xf32> to vector<8xf32>
    %58 = vector.shape_cast %57 : vector<8xf32> to vector<8x1xf32>
    %59 = vector.broadcast %58 : vector<8x1xf32> to vector<8x8xf32>
    %60 = arith.subf %56, %59 : vector<8x8xf32>
    %61 = math.exp %60 : vector<8x8xf32>
    %cst_30 = arith.constant dense<0.000000e+00> : vector<8xf32>
    %62 = vector.multi_reduction <add>, %61, %cst_30 [1] : vector<8x8xf32> to vector<8xf32>
    %63 = vector.shape_cast %62 : vector<8xf32> to vector<8x1xf32>
    %64 = vector.broadcast %63 : vector<8x1xf32> to vector<8x8xf32>
    %65 = arith.divf %61, %64 : vector<8x8xf32>
    %cst_31 = arith.constant dense<0.000000e+00> : vector<8x128xf32>
    %66 = tpu.matmul %65, %55, %cst_31 {dimension_numbers = #tpu.dot_dimension_numbers<[1], [0], [0], [1], [0, 0, 1, 1], [], []>} : vector<8x8xf32>, vector<8x128xf32>, vector<8x128xf32> -> vector<8x128xf32>
    %67 = vector.extract_strided_slice %51 {offsets = [0, 128], sizes = [8, 128], strides = [1, 1]} : vector<8x256xf32> to vector<8x128xf32>
    %68 = vector.extract_strided_slice %52 {offsets = [0, 128], sizes = [8, 128], strides = [1, 1]} : vector<8x512xf32> to vector<8x128xf32>
    %69 = vector.extract_strided_slice %52 {offsets = [0, 384], sizes = [8, 128], strides = [1, 1]} : vector<8x512xf32> to vector<8x128xf32>
    %cst_32 = arith.constant dense<0.000000e+00> : vector<8x8xf32>
    %70 = tpu.matmul %67, %68, %cst_32 {dimension_numbers = #tpu.dot_dimension_numbers<[1], [1], [0], [0], [0, 0, 1, 0], [], []>} : vector<8x128xf32>, vector<8x128xf32>, vector<8x8xf32> -> vector<8x8xf32>
    %cst_33 = arith.constant dense<0xFF800000> : vector<8xf32>
    %71 = vector.multi_reduction <maximumf>, %70, %cst_33 [1] : vector<8x8xf32> to vector<8xf32>
    %72 = vector.shape_cast %71 : vector<8xf32> to vector<8x1xf32>
    %73 = vector.broadcast %72 : vector<8x1xf32> to vector<8x8xf32>
    %74 = arith.subf %70, %73 : vector<8x8xf32>
    %75 = math.exp %74 : vector<8x8xf32>
    %cst_34 = arith.constant dense<0.000000e+00> : vector<8xf32>
    %76 = vector.multi_reduction <add>, %75, %cst_34 [1] : vector<8x8xf32> to vector<8xf32>
    %77 = vector.shape_cast %76 : vector<8xf32> to vector<8x1xf32>
    %78 = vector.broadcast %77 : vector<8x1xf32> to vector<8x8xf32>
    %79 = arith.divf %75, %78 : vector<8x8xf32>
    %cst_35 = arith.constant dense<0.000000e+00> : vector<8x128xf32>
    %80 = tpu.matmul %79, %69, %cst_35 {dimension_numbers = #tpu.dot_dimension_numbers<[1], [0], [0], [1], [0, 0, 1, 1], [], []>} : vector<8x8xf32>, vector<8x128xf32>, vector<8x128xf32> -> vector<8x128xf32>
    %81 = tpu.concatenate %66, %80 in 1 : vector<8x128xf32>, vector<8x128xf32> -> vector<8x256xf32>
    %cst_36 = arith.constant dense<0.000000e+00> : vector<8x32xf32>
    %82 = tpu.matmul %81, %4, %cst_36 {dimension_numbers = #tpu.dot_dimension_numbers<[1], [0], [0], [1], [0, 0, 1, 1], [], []>} : vector<8x256xf32>, vector<256x32xf32>, vector<8x32xf32> -> vector<8x32xf32>
    %83 = vector.broadcast %5 : vector<1x32xf32> to vector<8x32xf32>
    %84 = arith.addf %82, %83 : vector<8x32xf32>
    %c1 = arith.constant 1 : index
    %c0_37 = arith.constant 0 : index
    %c0_38 = arith.constant 0 : index
    %85 = vector.load %arg8[%c1, %c0_37, %c0_38] : memref<2x8x32xf32, #tpu.memory_space<vmem>>, vector<1x8x32xf32>
    %86 = vector.shape_cast %85 : vector<1x8x32xf32> to vector<8x32xf32>
    %87 = vector.shape_cast %84 : vector<8x32xf32> to vector<1x8x32xf32>
    tpu.vector_store %arg8[%c1, %c0_37, %c0_38], %87 {strides = array<i32>} : memref<2x8x32xf32, #tpu.memory_space<vmem>>, vector<1x8x32xf32>,
    return
  }
}

</mosaic_0001>

<llo_original>
// kernel: tpu_custom_call.1
$region0: #{tpu_custom_call.1}
  #allocation0 [shape = 'u32[]', space=smem, size = 0x4, offset = 0x4, fixed_abs, tag = 'smem constant byte address 0x4 - core index']
  #allocation1 [shape = 'u32[144,128]{1,0:T(1,128)}', space=vmem, size = 0x12000, scoped, tag = 'internal scratch']
  %s0 = inlined_call_operand.vmem [shape: f32[16,16], index: 0, kind: input, shape index: {}]
  %s1 = inlined_call_operand.vmem [shape: f32[16,16], index: 1, kind: input, shape index: {}]
  %s2 = inlined_call_operand.vmem [shape: f32[16,256], index: 2, kind: input, shape index: {}]
  %s3 = inlined_call_operand.vmem [shape: f32[1,256], index: 3, kind: input, shape index: {}]
  %s4 = inlined_call_operand.vmem [shape: f32[16,512], index: 4, kind: input, shape index: {}]
  %s5 = inlined_call_operand.vmem [shape: f32[1,512], index: 5, kind: input, shape index: {}]
  %s6 = inlined_call_operand.vmem [shape: f32[256,32], index: 6, kind: input, shape index: {}]
  %s7 = inlined_call_operand.vmem [shape: f32[1,32], index: 7, kind: input, shape index: {}]
  %s8 = inlined_call_operand.hbm [shape: f32[2,8,32], index: 8, kind: output, shape index: {}]
  %s9 = sld [smem:[#allocation0]]
  $region42: #{tpu_custom_call.1} parent=0
    _
  %s11 = ssub.s32 1, %s9
  %s12 = scalar_select 0, %s11, %s9
  $region1: #{tpu_custom_call.1} parent=0
    #allocation2 [shape = 'u8[8192]{0}', space=vmem, size = 0x2000, scoped, tag = 'output window, operand 0, single buffered']
    #allocation3 [shape = 's32[1]{0}', space=sflag, size = 0x4, scoped, tag = 'scoped memory for tpu_custom_call.1']
    %13 = vsyncpa [#allocation3], 0
    // Predicated region
    $region2: #{tpu_custom_call.1} parent=1 // pred_check
      _
    $region3: #{tpu_custom_call.1} parent=1 // pred_check_branch
      %15 = sbr.rel (0) target = $region5
    $region4: #{tpu_custom_call.1} parent=1 // pred_region
      _
    $region5: #{tpu_custom_call.1} parent=1 // pred_fallthru
      _
    // Predicated region
    $region6: #{tpu_custom_call.1} parent=1 // pred_check
      _
    $region7: #{tpu_custom_call.1} parent=1 // pred_check_branch
      %17 = sbr.rel (0) target = $region9
    $region8: #{tpu_custom_call.1} parent=1 // pred_region
      _
    $region9: #{tpu_custom_call.1} parent=1 // pred_fallthru
      _
    // Predicated region
    $region10: #{tpu_custom_call.1} parent=1 // pred_check
      _
    $region11: #{tpu_custom_call.1} parent=1 // pred_check_branch
      %19 = sbr.rel (0) target = $region13
    $region12: #{tpu_custom_call.1} parent=1 // pred_region
      _
    $region13: #{tpu_custom_call.1} parent=1 // pred_fallthru
      _
    // Predicated region
    $region14: #{tpu_custom_call.1} parent=1 // pred_check
      _
    $region15: #{tpu_custom_call.1} parent=1 // pred_check_branch
      %21 = sbr.rel (0) target = $region17
    $region16: #{tpu_custom_call.1} parent=1 // pred_region
      _
    $region17: #{tpu_custom_call.1} parent=1 // pred_fallthru
      _
    // Predicated region
    $region18: #{tpu_custom_call.1} parent=1 // pred_check
      _
    $region19: #{tpu_custom_call.1} parent=1 // pred_check_branch
      %23 = sbr.rel (0) target = $region21
    $region20: #{tpu_custom_call.1} parent=1 // pred_region
      _
    $region21: #{tpu_custom_call.1} parent=1 // pred_fallthru
      _
    // Predicated region
    $region22: #{tpu_custom_call.1} parent=1 // pred_check
      _
    $region23: #{tpu_custom_call.1} parent=1 // pred_check_branch
      %25 = sbr.rel (0) target = $region25
    $region24: #{tpu_custom_call.1} parent=1 // pred_region
      _
    $region25: #{tpu_custom_call.1} parent=1 // pred_fallthru
      _
    // Predicated region
    $region26: #{tpu_custom_call.1} parent=1 // pred_check
      _
    $region27: #{tpu_custom_call.1} parent=1 // pred_check_branch
      %27 = sbr.rel (0) target = $region29
    $region28: #{tpu_custom_call.1} parent=1 // pred_region
      _
    $region29: #{tpu_custom_call.1} parent=1 // pred_fallthru
      _
    // Predicated region
    $region30: #{tpu_custom_call.1} parent=1 // pred_check
      _
    $region31: #{tpu_custom_call.1} parent=1 // pred_check_branch
      %29 = sbr.rel (0) target = $region33
    $region32: #{tpu_custom_call.1} parent=1 // pred_region
      _
    $region33: #{tpu_custom_call.1} parent=1 // pred_fallthru
      _
    %v30 = vld [vmem:[%s2] sm:$0xff]
    %v31 = vld [vmem:[%s2 + $0x8] sm:$0xff]
    %v32 = vld [vmem:[%s2 + $0x10] sm:$0xff]
    %v33 = vld [vmem:[%s2 + $0x18] sm:$0xff]
    %v34 = vld [vmem:[%s3] sm:$0x3]
    %v35 = vld [vmem:[%s4] sm:$0xff]
    %v36 = vld [vmem:[%s4 + $0x8] sm:$0xff]
    %v37 = vld [vmem:[%s4 + $0x10] sm:$0xff]
    %v38 = vld [vmem:[%s4 + $0x18] sm:$0xff]
    %v39 = vld [vmem:[%s4 + $0x20] sm:$0xff]
    %v40 = vld [vmem:[%s4 + $0x28] sm:$0xff]
    %v41 = vld [vmem:[%s4 + $0x30] sm:$0xff]
    %v42 = vld [vmem:[%s4 + $0x38] sm:$0xff]
    %v43 = vld [vmem:[%s5] sm:$0xf]
    %v44 = vld [vmem:[%s6] sm:$0xff]
    %v45 = vld [vmem:[%s6 + $0x8] sm:$0xff]
    %v46 = vld [vmem:[%s6 + $0x10] sm:$0xff]
    %v47 = vld [vmem:[%s6 + $0x18] sm:$0xff]
    %v48 = vld [vmem:[%s6 + $0x20] sm:$0xff]
    %v49 = vld [vmem:[%s6 + $0x28] sm:$0xff]
    %v50 = vld [vmem:[%s6 + $0x30] sm:$0xff]
    %v51 = vld [vmem:[%s6 + $0x38] sm:$0xff]
    %v52 = vld [vmem:[%s6 + $0x40] sm:$0xff]
    %v53 = vld [vmem:[%s6 + $0x48] sm:$0xff]
    %v54 = vld [vmem:[%s6 + $0x50] sm:$0xff]
    %v55 = vld [vmem:[%s6 + $0x58] sm:$0xff]
    %v56 = vld [vmem:[%s6 + $0x60] sm:$0xff]
    %v57 = vld [vmem:[%s6 + $0x68] sm:$0xff]
    %v58 = vld [vmem:[%s6 + $0x70] sm:$0xff]
    %v59 = vld [vmem:[%s6 + $0x78] sm:$0xff]
    %v60 = vld [vmem:[%s6 + $0x80] sm:$0xff]
    %v61 = vld [vmem:[%s6 + $0x88] sm:$0xff]
    %v62 = vld [vmem:[%s6 + $0x90] sm:$0xff]
    %v63 = vld [vmem:[%s6 + $0x98] sm:$0xff]
    %v64 = vld [vmem:[%s6 + $0xa0] sm:$0xff]
    %v65 = vld [vmem:[%s6 + $0xa8] sm:$0xff]
    %v66 = vld [vmem:[%s6 + $0xb0] sm:$0xff]
    %v67 = vld [vmem:[%s6 + $0xb8] sm:$0xff]
    %v68 = vld [vmem:[%s6 + $0xc0] sm:$0xff]
    %v69 = vld [vmem:[%s6 + $0xc8] sm:$0xff]
    %v70 = vld [vmem:[%s6 + $0xd0] sm:$0xff]
    %v71 = vld [vmem:[%s6 + $0xd8] sm:$0xff]
    %v72 = vld [vmem:[%s6 + $0xe0] sm:$0xff]
    %v73 = vld [vmem:[%s6 + $0xe8] sm:$0xff]
    %v74 = vld [vmem:[%s6 + $0xf0] sm:$0xff]
    %v75 = vld [vmem:[%s6 + $0xf8] sm:$0xff]
    %v76 = vld [vmem:[%s7] sm:$0x1]
    %v77 = vld [vmem:[%s0] sm:$0xff]
    %v78 = vld [vmem:[%s0 + $0x8] sm:$0xff]
    %v80 = vlaneseq
    %v81 = vshrl.u32 %v80, 7
    %v82 = vsub.s32 0, %v81
    %v83 = vrot.slane %v34, %v82
    %v84 = vlaneseq
    %v85 = vshrl.u32 %v84, 7
    %v86 = vsub.s32 1, %v85
    %v87 = vrot.slane %v34, %v86
    %vm90 = vcmask 130048
    %v92 = vsel %vm90, %v77, 0
    %v95 = vsel %vm90, %v78, 0
    %97 = vmatprep.subr.mxu0 %v31
    %98 = vmatpush1.msra.mxu0 %v30
    %99 = vmatprep.subr.mxu0 %v33
    %100 = vmatpush1.msra.mxu0 %v32
    %101 = vmatprep.subr.mxu0 0.0
    %102 = vmatpush1.msra.mxu0 0.0
    %103 = vmatprep.subr.mxu0 0.0
    %104 = vmatpush1.msra.mxu0 0.0
    %105 = vmatprep.subr.mxu0 0.0
    %106 = vmatpush1.msra.mxu0 0.0
    %107 = vmatprep.subr.mxu0 0.0
    %108 = vmatpush1.msra.mxu0 0.0
    %109 = vmatprep.subr.mxu0 0.0
    %110 = vmatpush1.msra.mxu0 0.0
    %111 = vmatprep.subr.mxu0 0.0
    %112 = vmatpush1.msra.mxu0 0.0
    %113 = vmatprep.subr.mxu0 0.0
    %114 = vmatpush1.msra.mxu0 0.0
    %115 = vmatprep.subr.mxu0 0.0
    %116 = vmatpush1.msra.mxu0 0.0
    %117 = vmatprep.subr.mxu0 0.0
    %118 = vmatpush1.msra.mxu0 0.0
    %119 = vmatprep.subr.mxu0 0.0
    %120 = vmatpush1.msra.mxu0 0.0
    %121 = vmatprep.subr.mxu0 0.0
    %122 = vmatpush1.msra.mxu0 0.0
    %123 = vmatprep.subr.mxu0 0.0
    %124 = vmatpush1.msra.mxu0 0.0
    %125 = vmatprep.subr.mxu0 0.0
    %126 = vmatpush1.msra.mxu0 0.0
    %127 = vmatprep.subr.mxu0 0.0
    %128 = vmatpush1.msra.mxu0 0.0
    %129 = vmatprep.subr.mxu0 0.0
    %130 = vmatpush1.msra.mxu0 0.0
    %131 = vmatprep.subr.mxu0 0.0
    %132 = vmatpush1.msra.mxu0 0.0
    %133 = vmatprep.subr.mxu0 0.0
    %134 = vmatpush1.msra.mxu0 0.0
    %135 = vmatprep.subr.mxu0 0.0
    %136 = vmatpush1.msra.mxu0 0.0
    %137 = vmatprep.subr.mxu0 0.0
    %138 = vmatpush1.msra.mxu0 0.0
    %139 = vmatprep.subr.mxu0 0.0
    %140 = vmatpush1.msra.mxu0 0.0
    %141 = vmatprep.subr.mxu0 0.0
    %142 = vmatpush1.msra.mxu0 0.0
    %143 = vmatprep.subr.mxu0 0.0
    %144 = vmatpush1.msra.mxu0 0.0
    %145 = vmatprep.subr.mxu0 0.0
    %146 = vmatpush1.msra.mxu0 0.0
    %147 = vmatprep.subr.mxu0 0.0
    %148 = vmatpush1.msra.mxu0 0.0
    %149 = vmatprep.subr.mxu0 0.0
    %150 = vmatpush1.msra.mxu0 0.0
    %151 = vmatprep.subr.mxu0 0.0
    %152 = vmatpush1.msra.mxu0 0.0
    %153 = vmatprep.subr.mxu0 0.0
    %154 = vmatpush1.msra.mxu0 0.0
    %155 = vmatprep.subr.mxu0 0.0
    %156 = vmatpush1.msra.mxu0 0.0
    %157 = vmatprep.subr.mxu0 0.0
    %158 = vmatpush1.msra.mxu0 0.0
    %159 = vmatprep.subr.mxu0 0.0
    %160 = vmatpush1.msra.mxu0 0.0
    %161 = vmatprep.mubr.f32.mxu0 0.0
    %162 = vmatmul.mubr.f32.gmra.mrb[0].mxu0 %v92
    %v163 = vpop.f32.mrb[0].mxu0
    %v164 = vadd.f32 %v83, %v163
    %v165 = vpop.f32.mrb[0].mxu0
    %v166 = vadd.f32 %v87, %v165
    %167 = vmatprep.mubr.f32.mxu0 0.0
    %168 = vmatmul.mubr.f32.gmra.mrb[0].mxu0 %v95
    %v169 = vpop.f32.mrb[0].mxu0
    %v170 = vadd.f32 %v83, %v169
    %v171 = vpop.f32.mrb[0].mxu0
    %v172 = vadd.f32 %v87, %v171
    %173 = vdwg.mxu0
    %v174 = vld [vmem:[%s1] sm:$0xff]
    %v175 = vld [vmem:[%s1 + $0x8] sm:$0xff]
    %v177 = vlaneseq
    %v178 = vshrl.u32 %v177, 7
    %v179 = vsub.s32 0, %v178
    %v180 = vrot.slane %v43, %v179
    %v181 = vlaneseq
    %v182 = vshrl.u32 %v181, 7
    %v183 = vsub.s32 1, %v182
    %v184 = vrot.slane %v43, %v183
    %v185 = vlaneseq
    %v186 = vshrl.u32 %v185, 7
    %v187 = vsub.s32 2, %v186
    %v188 = vrot.slane %v43, %v187
    %v189 = vlaneseq
    %v190 = vshrl.u32 %v189, 7
    %v191 = vsub.s32 3, %v190
    %v192 = vrot.slane %v43, %v191
    %v198 = vsel %vm90, %v174, 0
    %v201 = vsel %vm90, %v175, 0
    %203 = vmatprep.subr.mxu0 %v36
    %204 = vmatpush1.msra.mxu0 %v35
    %205 = vmatprep.subr.mxu0 %v40
    %206 = vmatpush1.msra.mxu0 %v39
    %207 = vmatprep.subr.mxu0 0.0
    %208 = vmatpush1.msra.mxu0 0.0
    %209 = vmatprep.subr.mxu0 0.0
    %210 = vmatpush1.msra.mxu0 0.0
    %211 = vmatprep.subr.mxu0 0.0
    %212 = vmatpush1.msra.mxu0 0.0
    %213 = vmatprep.subr.mxu0 0.0
    %214 = vmatpush1.msra.mxu0 0.0
    %215 = vmatprep.subr.mxu0 0.0
    %216 = vmatpush1.msra.mxu0 0.0
    %217 = vmatprep.subr.mxu0 0.0
    %218 = vmatpush1.msra.mxu0 0.0
    %219 = vmatprep.subr.mxu0 0.0
    %220 = vmatpush1.msra.mxu0 0.0
    %221 = vmatprep.subr.mxu0 0.0
    %222 = vmatpush1.msra.mxu0 0.0
    %223 = vmatprep.subr.mxu0 0.0
    %224 = vmatpush1.msra.mxu0 0.0
    %225 = vmatprep.subr.mxu0 0.0
    %226 = vmatpush1.msra.mxu0 0.0
    %227 = vmatprep.subr.mxu0 0.0
    %228 = vmatpush1.msra.mxu0 0.0
    %229 = vmatprep.subr.mxu0 0.0
    %230 = vmatpush1.msra.mxu0 0.0
    %231 = vmatprep.subr.mxu0 0.0
    %232 = vmatpush1.msra.mxu0 0.0
    %233 = vmatprep.subr.mxu0 0.0
    %234 = vmatpush1.msra.mxu0 0.0
    %235 = vmatprep.subr.mxu0 0.0
    %236 = vmatpush1.msra.mxu0 0.0
    %237 = vmatprep.subr.mxu0 0.0
    %238 = vmatpush1.msra.mxu0 0.0
    %239 = vmatprep.subr.mxu0 0.0
    %240 = vmatpush1.msra.mxu0 0.0
    %241 = vmatprep.subr.mxu0 0.0
    %242 = vmatpush1.msra.mxu0 0.0
    %243 = vmatprep.subr.mxu0 0.0
    %244 = vmatpush1.msra.mxu0 0.0
    %245 = vmatprep.subr.mxu0 0.0
    %246 = vmatpush1.msra.mxu0 0.0
    %247 = vmatprep.subr.mxu0 0.0
    %248 = vmatpush1.msra.mxu0 0.0
    %249 = vmatprep.subr.mxu0 0.0
    %250 = vmatpush1.msra.mxu0 0.0
    %251 = vmatprep.subr.mxu0 0.0
    %252 = vmatpush1.msra.mxu0 0.0
    %253 = vmatprep.subr.mxu0 0.0
    %254 = vmatpush1.msra.mxu0 0.0
    %255 = vmatprep.subr.mxu0 0.0
    %256 = vmatpush1.msra.mxu0 0.0
    %257 = vmatprep.subr.mxu0 0.0
    %258 = vmatpush1.msra.mxu0 0.0
    %259 = vmatprep.subr.mxu0 0.0
    %260 = vmatpush1.msra.mxu0 0.0
    %261 = vmatprep.subr.mxu0 0.0
    %262 = vmatpush1.msra.mxu0 0.0
    %263 = vmatprep.subr.mxu0 0.0
    %264 = vmatpush1.msra.mxu0 0.0
    %265 = vmatprep.subr.mxu0 0.0
    %266 = vmatpush1.msra.mxu0 0.0
    %267 = vmatprep.mubr.f32.mxu0 0.0
    %268 = vmatmul.mubr.f32.gmra.mrb[0].mxu0 %v198
    %v269 = vpop.f32.mrb[0].mxu0
    %v270 = vadd.f32 %v180, %v269
    %v271 = vpop.f32.mrb[0].mxu0
    %v272 = vadd.f32 %v184, %v271
    %273 = vmatprep.mubr.f32.mxu0 0.0
    %274 = vmatmul.mubr.f32.gmra.mrb[0].mxu0 %v201
    %v275 = vpop.f32.mrb[0].mxu0
    %v276 = vadd.f32 %v180, %v275
    %v277 = vpop.f32.mrb[0].mxu0
    %v278 = vadd.f32 %v184, %v277
    %279 = vdwg.mxu0
    %280 = vmatprep.subr.mxu0 %v38
    %281 = vmatpush1.msra.mxu0 %v37
    %282 = vmatprep.subr.mxu0 %v42
    %283 = vmatpush1.msra.mxu0 %v41
    %284 = vmatprep.subr.mxu0 0.0
    %285 = vmatpush1.msra.mxu0 0.0
    %286 = vmatprep.subr.mxu0 0.0
    %287 = vmatpush1.msra.mxu0 0.0
    %288 = vmatprep.subr.mxu0 0.0
    %289 = vmatpush1.msra.mxu0 0.0
    %290 = vmatprep.subr.mxu0 0.0
    %291 = vmatpush1.msra.mxu0 0.0
    %292 = vmatprep.subr.mxu0 0.0
    %293 = vmatpush1.msra.mxu0 0.0
    %294 = vmatprep.subr.mxu0 0.0
    %295 = vmatpush1.msra.mxu0 0.0
    %296 = vmatprep.subr.mxu0 0.0
    %297 = vmatpush1.msra.mxu0 0.0
    %298 = vmatprep.subr.mxu0 0.0
    %299 = vmatpush1.msra.mxu0 0.0
    %300 = vmatprep.subr.mxu0 0.0
    %301 = vmatpush1.msra.mxu0 0.0
    %302 = vmatprep.subr.mxu0 0.0
    %303 = vmatpush1.msra.mxu0 0.0
    %304 = vmatprep.subr.mxu0 0.0
    %305 = vmatpush1.msra.mxu0 0.0
    %306 = vmatprep.subr.mxu0 0.0
    %307 = vmatpush1.msra.mxu0 0.0
    %308 = vmatprep.subr.mxu0 0.0
    %309 = vmatpush1.msra.mxu0 0.0
    %310 = vmatprep.subr.mxu0 0.0
    %311 = vmatpush1.msra.mxu0 0.0
    %312 = vmatprep.subr.mxu0 0.0
    %313 = vmatpush1.msra.mxu0 0.0
    %314 = vmatprep.subr.mxu0 0.0
    %315 = vmatpush1.msra.mxu0 0.0
    %316 = vmatprep.subr.mxu0 0.0
    %317 = vmatpush1.msra.mxu0 0.0
    %318 = vmatprep.subr.mxu0 0.0
    %319 = vmatpush1.msra.mxu0 0.0
    %320 = vmatprep.subr.mxu0 0.0
    %321 = vmatpush1.msra.mxu0 0.0
    %322 = vmatprep.subr.mxu0 0.0
    %323 = vmatpush1.msra.mxu0 0.0
    %324 = vmatprep.subr.mxu0 0.0
    %325 = vmatpush1.msra.mxu0 0.0
    %326 = vmatprep.subr.mxu0 0.0
    %327 = vmatpush1.msra.mxu0 0.0
    %328 = vmatprep.subr.mxu0 0.0
    %329 = vmatpush1.msra.mxu0 0.0
    %330 = vmatprep.subr.mxu0 0.0
    %331 = vmatpush1.msra.mxu0 0.0
    %332 = vmatprep.subr.mxu0 0.0
    %333 = vmatpush1.msra.mxu0 0.0
    %334 = vmatprep.subr.mxu0 0.0
    %335 = vmatpush1.msra.mxu0 0.0
    %336 = vmatprep.subr.mxu0 0.0
    %337 = vmatpush1.msra.mxu0 0.0
    %338 = vmatprep.subr.mxu0 0.0
    %339 = vmatpush1.msra.mxu0 0.0
    %340 = vmatprep.subr.mxu0 0.0
    %341 = vmatpush1.msra.mxu0 0.0
    %342 = vmatprep.subr.mxu0 0.0
    %343 = vmatpush1.msra.mxu0 0.0
    %344 = vmatprep.mubr.f32.mxu0 0.0
    %345 = vmatmul.mubr.f32.gmra.mrb[0].mxu0 %v198
    %v346 = vpop.f32.mrb[0].mxu0
    %v347 = vadd.f32 %v188, %v346
    %v348 = vpop.f32.mrb[0].mxu0
    %v349 = vadd.f32 %v192, %v348
    %350 = vmatprep.mubr.f32.mxu0 0.0
    %351 = vmatmul.mubr.f32.gmra.mrb[0].mxu0 %v201
    %v352 = vpop.f32.mrb[0].mxu0
    %v353 = vadd.f32 %v188, %v352
    %v354 = vpop.f32.mrb[0].mxu0
    %v355 = vadd.f32 %v192, %v354
    %356 = vdwg.mxu0
    %357 = vmatprep.subr.mxu0 0.0
    %358 = vmatpush1.xpose.msra.mxu0 %v270
    %359 = vmatprep.subr.mxu0 0.0
    %360 = vmatpush1.xpose.msra.mxu0 0.0
    %361 = vmatprep.subr.mxu0 0.0
    %362 = vmatpush1.xpose.msra.mxu0 0.0
    %363 = vmatprep.subr.mxu0 0.0
    %364 = vmatpush1.xpose.msra.mxu0 0.0
    %365 = vmatprep.subr.mxu0 0.0
    %366 = vmatpush1.xpose.msra.mxu0 0.0
    %367 = vmatprep.subr.mxu0 0.0
    %368 = vmatpush1.xpose.msra.mxu0 0.0
    %369 = vmatprep.subr.mxu0 0.0
    %370 = vmatpush1.xpose.msra.mxu0 0.0
    %371 = vmatprep.subr.mxu0 0.0
    %372 = vmatpush1.xpose.msra.mxu0 0.0
    %373 = vmatprep.subr.mxu0 0.0
    %374 = vmatpush1.xpose.msra.mxu0 0.0
    %375 = vmatprep.subr.mxu0 0.0
    %376 = vmatpush1.xpose.msra.mxu0 0.0
    %377 = vmatprep.subr.mxu0 0.0
    %378 = vmatpush1.xpose.msra.mxu0 0.0
    %379 = vmatprep.subr.mxu0 0.0
    %380 = vmatpush1.xpose.msra.mxu0 0.0
    %381 = vmatprep.subr.mxu0 0.0
    %382 = vmatpush1.xpose.msra.mxu0 0.0
    %383 = vmatprep.subr.mxu0 0.0
    %384 = vmatpush1.xpose.msra.mxu0 0.0
    %385 = vmatprep.subr.mxu0 0.0
    %386 = vmatpush1.xpose.msra.mxu0 0.0
    %387 = vmatprep.subr.mxu0 0.0
    %388 = vmatpush1.xpose.msra.mxu0 0.0
    %389 = vmatprep.subr.mxu0 0.0
    %390 = vmatpush1.xpose.msra.mxu0 0.0
    %391 = vmatprep.subr.mxu0 0.0
    %392 = vmatpush1.xpose.msra.mxu0 0.0
    %393 = vmatprep.subr.mxu0 0.0
    %394 = vmatpush1.xpose.msra.mxu0 0.0
    %395 = vmatprep.subr.mxu0 0.0
    %396 = vmatpush1.xpose.msra.mxu0 0.0
    %397 = vmatprep.subr.mxu0 0.0
    %398 = vmatpush1.xpose.msra.mxu0 0.0
    %399 = vmatprep.subr.mxu0 0.0
    %400 = vmatpush1.xpose.msra.mxu0 0.0
    %401 = vmatprep.subr.mxu0 0.0
    %402 = vmatpush1.xpose.msra.mxu0 0.0
    %403 = vmatprep.subr.mxu0 0.0
    %404 = vmatpush1.xpose.msra.mxu0 0.0
    %405 = vmatprep.subr.mxu0 0.0
    %406 = vmatpush1.xpose.msra.mxu0 0.0
    %407 = vmatprep.subr.mxu0 0.0
    %408 = vmatpush1.xpose.msra.mxu0 0.0
    %409 = vmatprep.subr.mxu0 0.0
    %410 = vmatpush1.xpose.msra.mxu0 0.0
    %411 = vmatprep.subr.mxu0 0.0
    %412 = vmatpush1.xpose.msra.mxu0 0.0
    %413 = vmatprep.subr.mxu0 0.0
    %414 = vmatpush1.xpose.msra.mxu0 0.0
    %415 = vmatprep.subr.mxu0 0.0
    %416 = vmatpush1.xpose.msra.mxu0 0.0
    %417 = vmatprep.subr.mxu0 0.0
    %418 = vmatpush1.xpose.msra.mxu0 0.0
    %419 = vmatprep.subr.mxu0 0.0
    %420 = vmatpush1.xpose.msra.mxu0 0.0
    %421 = vmatprep.mubr.f32.mxu0 0.0
    %422 = vmatmul.mubr.f32.gmra.mrb[0].mxu0 %v164
    %v423 = vpop.f32.mrb[0].mxu0
    %v424 = vadd.f32 0.0, %v423
    %v425 = vpop.f32.mrb[0].mxu0
    %426 = vdwg.mxu0
    %vm427 = vcmask 64512
    %v428 = vsel %vm427, %v424, -inf
    %429 = vmax.xlane.f32.xlu0 %v428
    %v430 = vpop.xlane.xlu0 %429
    %v431 = vsub.f32 %v424, %v430
    %v432 = vmul.f32 %v431, 1.442695
    %v433 = vpow.pop %v432
    %v434 = vsel %vm427, %v433, 0.0
    %435 = vadd.xlane.f32.xlu0 %v434
    %v436 = vpop.xlane.xlu0 %435
    %v437 = vrcp.pop %v436
    %v438 = vmul.f32 %v433, %v437
    %v440 = vsel %vm427, %v438, 0
    %442 = vmatprep.subr.mxu0 0.0
    %443 = vmatpush1.msra.mxu0 %v347
    %444 = vmatprep.subr.mxu0 0.0
    %445 = vmatpush1.msra.mxu0 0.0
    %446 = vmatprep.subr.mxu0 0.0
    %447 = vmatpush1.msra.mxu0 0.0
    %448 = vmatprep.subr.mxu0 0.0
    %449 = vmatpush1.msra.mxu0 0.0
    %450 = vmatprep.subr.mxu0 0.0
    %451 = vmatpush1.msra.mxu0 0.0
    %452 = vmatprep.subr.mxu0 0.0
    %453 = vmatpush1.msra.mxu0 0.0
    %454 = vmatprep.subr.mxu0 0.0
    %455 = vmatpush1.msra.mxu0 0.0
    %456 = vmatprep.subr.mxu0 0.0
    %457 = vmatpush1.msra.mxu0 0.0
    %458 = vmatprep.subr.mxu0 0.0
    %459 = vmatpush1.msra.mxu0 0.0
    %460 = vmatprep.subr.mxu0 0.0
    %461 = vmatpush1.msra.mxu0 0.0
    %462 = vmatprep.subr.mxu0 0.0
    %463 = vmatpush1.msra.mxu0 0.0
    %464 = vmatprep.subr.mxu0 0.0
    %465 = vmatpush1.msra.mxu0 0.0
    %466 = vmatprep.subr.mxu0 0.0
    %467 = vmatpush1.msra.mxu0 0.0
    %468 = vmatprep.subr.mxu0 0.0
    %469 = vmatpush1.msra.mxu0 0.0
    %470 = vmatprep.subr.mxu0 0.0
    %471 = vmatpush1.msra.mxu0 0.0
    %472 = vmatprep.subr.mxu0 0.0
    %473 = vmatpush1.msra.mxu0 0.0
    %474 = vmatprep.subr.mxu0 0.0
    %475 = vmatpush1.msra.mxu0 0.0
    %476 = vmatprep.subr.mxu0 0.0
    %477 = vmatpush1.msra.mxu0 0.0
    %478 = vmatprep.subr.mxu0 0.0
    %479 = vmatpush1.msra.mxu0 0.0
    %480 = vmatprep.subr.mxu0 0.0
    %481 = vmatpush1.msra.mxu0 0.0
    %482 = vmatprep.subr.mxu0 0.0
    %483 = vmatpush1.msra.mxu0 0.0
    %484 = vmatprep.subr.mxu0 0.0
    %485 = vmatpush1.msra.mxu0 0.0
    %486 = vmatprep.subr.mxu0 0.0
    %487 = vmatpush1.msra.mxu0 0.0
    %488 = vmatprep.subr.mxu0 0.0
    %489 = vmatpush1.msra.mxu0 0.0
    %490 = vmatprep.subr.mxu0 0.0
    %491 = vmatpush1.msra.mxu0 0.0
    %492 = vmatprep.subr.mxu0 0.0
    %493 = vmatpush1.msra.mxu0 0.0
    %494 = vmatprep.subr.mxu0 0.0
    %495 = vmatpush1.msra.mxu0 0.0
    %496 = vmatprep.subr.mxu0 0.0
    %497 = vmatpush1.msra.mxu0 0.0
    %498 = vmatprep.subr.mxu0 0.0
    %499 = vmatpush1.msra.mxu0 0.0
    %500 = vmatprep.subr.mxu0 0.0
    %501 = vmatpush1.msra.mxu0 0.0
    %502 = vmatprep.subr.mxu0 0.0
    %503 = vmatpush1.msra.mxu0 0.0
    %504 = vmatprep.subr.mxu0 0.0
    %505 = vmatpush1.msra.mxu0 0.0
    %506 = vmatprep.mubr.f32.mxu0 0.0
    %507 = vmatmul.mubr.f32.gmra.mrb[0].mxu0 %v440
    %v508 = vpop.f32.mrb[0].mxu0
    %v509 = vadd.f32 0.0, %v508
    %v510 = vpop.f32.mrb[0].mxu0
    %511 = vdwg.mxu0
    %512 = vmatprep.subr.mxu0 0.0
    %513 = vmatpush1.xpose.msra.mxu0 %v272
    %514 = vmatprep.subr.mxu0 0.0
    %515 = vmatpush1.xpose.msra.mxu0 0.0
    %516 = vmatprep.subr.mxu0 0.0
    %517 = vmatpush1.xpose.msra.mxu0 0.0
    %518 = vmatprep.subr.mxu0 0.0
    %519 = vmatpush1.xpose.msra.mxu0 0.0
    %520 = vmatprep.subr.mxu0 0.0
    %521 = vmatpush1.xpose.msra.mxu0 0.0
    %522 = vmatprep.subr.mxu0 0.0
    %523 = vmatpush1.xpose.msra.mxu0 0.0
    %524 = vmatprep.subr.mxu0 0.0
    %525 = vmatpush1.xpose.msra.mxu0 0.0
    %526 = vmatprep.subr.mxu0 0.0
    %527 = vmatpush1.xpose.msra.mxu0 0.0
    %528 = vmatprep.subr.mxu0 0.0
    %529 = vmatpush1.xpose.msra.mxu0 0.0
    %530 = vmatprep.subr.mxu0 0.0
    %531 = vmatpush1.xpose.msra.mxu0 0.0
    %532 = vmatprep.subr.mxu0 0.0
    %533 = vmatpush1.xpose.msra.mxu0 0.0
    %534 = vmatprep.subr.mxu0 0.0
    %535 = vmatpush1.xpose.msra.mxu0 0.0
    %536 = vmatprep.subr.mxu0 0.0
    %537 = vmatpush1.xpose.msra.mxu0 0.0
    %538 = vmatprep.subr.mxu0 0.0
    %539 = vmatpush1.xpose.msra.mxu0 0.0
    %540 = vmatprep.subr.mxu0 0.0
    %541 = vmatpush1.xpose.msra.mxu0 0.0
    %542 = vmatprep.subr.mxu0 0.0
    %543 = vmatpush1.xpose.msra.mxu0 0.0
    %544 = vmatprep.subr.mxu0 0.0
    %545 = vmatpush1.xpose.msra.mxu0 0.0
    %546 = vmatprep.subr.mxu0 0.0
    %547 = vmatpush1.xpose.msra.mxu0 0.0
    %548 = vmatprep.subr.mxu0 0.0
    %549 = vmatpush1.xpose.msra.mxu0 0.0
    %550 = vmatprep.subr.mxu0 0.0
    %551 = vmatpush1.xpose.msra.mxu0 0.0
    %552 = vmatprep.subr.mxu0 0.0
    %553 = vmatpush1.xpose.msra.mxu0 0.0
    %554 = vmatprep.subr.mxu0 0.0
    %555 = vmatpush1.xpose.msra.mxu0 0.0
    %556 = vmatprep.subr.mxu0 0.0
    %557 = vmatpush1.xpose.msra.mxu0 0.0
    %558 = vmatprep.subr.mxu0 0.0
    %559 = vmatpush1.xpose.msra.mxu0 0.0
    %560 = vmatprep.subr.mxu0 0.0
    %561 = vmatpush1.xpose.msra.mxu0 0.0
    %562 = vmatprep.subr.mxu0 0.0
    %563 = vmatpush1.xpose.msra.mxu0 0.0
    %564 = vmatprep.subr.mxu0 0.0
    %565 = vmatpush1.xpose.msra.mxu0 0.0
    %566 = vmatprep.subr.mxu0 0.0
    %567 = vmatpush1.xpose.msra.mxu0 0.0
    %568 = vmatprep.subr.mxu0 0.0
    %569 = vmatpush1.xpose.msra.mxu0 0.0
    %570 = vmatprep.subr.mxu0 0.0
    %571 = vmatpush1.xpose.msra.mxu0 0.0
    %572 = vmatprep.subr.mxu0 0.0
    %573 = vmatpush1.xpose.msra.mxu0 0.0
    %574 = vmatprep.subr.mxu0 0.0
    %575 = vmatpush1.xpose.msra.mxu0 0.0
    %576 = vmatprep.mubr.f32.mxu0 0.0
    %577 = vmatmul.mubr.f32.gmra.mrb[0].mxu0 %v166
    %v578 = vpop.f32.mrb[0].mxu0
    %v579 = vadd.f32 0.0, %v578
    %v580 = vpop.f32.mrb[0].mxu0
    %581 = vdwg.mxu0
    %v582 = vsel %vm427, %v579, -inf
    %583 = vmax.xlane.f32.xlu0 %v582
    %v584 = vpop.xlane.xlu0 %583
    %v585 = vsub.f32 %v579, %v584
    %v586 = vmul.f32 %v585, 1.442695
    %v587 = vpow.pop %v586
    %v588 = vsel %vm427, %v587, 0.0
    %589 = vadd.xlane.f32.xlu0 %v588
    %v590 = vpop.xlane.xlu0 %589
    %v591 = vrcp.pop %v590
    %v592 = vmul.f32 %v587, %v591
    %v594 = vsel %vm427, %v592, 0
    %596 = vmatprep.subr.mxu0 0.0
    %597 = vmatpush1.msra.mxu0 %v349
    %598 = vmatprep.subr.mxu0 0.0
    %599 = vmatpush1.msra.mxu0 0.0
    %600 = vmatprep.subr.mxu0 0.0
    %601 = vmatpush1.msra.mxu0 0.0
    %602 = vmatprep.subr.mxu0 0.0
    %603 = vmatpush1.msra.mxu0 0.0
    %604 = vmatprep.subr.mxu0 0.0
    %605 = vmatpush1.msra.mxu0 0.0
    %606 = vmatprep.subr.mxu0 0.0
    %607 = vmatpush1.msra.mxu0 0.0
    %608 = vmatprep.subr.mxu0 0.0
    %609 = vmatpush1.msra.mxu0 0.0
    %610 = vmatprep.subr.mxu0 0.0
    %611 = vmatpush1.msra.mxu0 0.0
    %612 = vmatprep.subr.mxu0 0.0
    %613 = vmatpush1.msra.mxu0 0.0
    %614 = vmatprep.subr.mxu0 0.0
    %615 = vmatpush1.msra.mxu0 0.0
    %616 = vmatprep.subr.mxu0 0.0
    %617 = vmatpush1.msra.mxu0 0.0
    %618 = vmatprep.subr.mxu0 0.0
    %619 = vmatpush1.msra.mxu0 0.0
    %620 = vmatprep.subr.mxu0 0.0
    %621 = vmatpush1.msra.mxu0 0.0
    %622 = vmatprep.subr.mxu0 0.0
    %623 = vmatpush1.msra.mxu0 0.0
    %624 = vmatprep.subr.mxu0 0.0
    %625 = vmatpush1.msra.mxu0 0.0
    %626 = vmatprep.subr.mxu0 0.0
    %627 = vmatpush1.msra.mxu0 0.0
    %628 = vmatprep.subr.mxu0 0.0
    %629 = vmatpush1.msra.mxu0 0.0
    %630 = vmatprep.subr.mxu0 0.0
    %631 = vmatpush1.msra.mxu0 0.0
    %632 = vmatprep.subr.mxu0 0.0
    %633 = vmatpush1.msra.mxu0 0.0
    %634 = vmatprep.subr.mxu0 0.0
    %635 = vmatpush1.msra.mxu0 0.0
    %636 = vmatprep.subr.mxu0 0.0
    %637 = vmatpush1.msra.mxu0 0.0
    %638 = vmatprep.subr.mxu0 0.0
    %639 = vmatpush1.msra.mxu0 0.0
    %640 = vmatprep.subr.mxu0 0.0
    %641 = vmatpush1.msra.mxu0 0.0
    %642 = vmatprep.subr.mxu0 0.0
    %643 = vmatpush1.msra.mxu0 0.0
    %644 = vmatprep.subr.mxu0 0.0
    %645 = vmatpush1.msra.mxu0 0.0
    %646 = vmatprep.subr.mxu0 0.0
    %647 = vmatpush1.msra.mxu0 0.0
    %648 = vmatprep.subr.mxu0 0.0
    %649 = vmatpush1.msra.mxu0 0.0
    %650 = vmatprep.subr.mxu0 0.0
    %651 = vmatpush1.msra.mxu0 0.0
    %652 = vmatprep.subr.mxu0 0.0
    %653 = vmatpush1.msra.mxu0 0.0
    %654 = vmatprep.subr.mxu0 0.0
    %655 = vmatpush1.msra.mxu0 0.0
    %656 = vmatprep.subr.mxu0 0.0
    %657 = vmatpush1.msra.mxu0 0.0
    %658 = vmatprep.subr.mxu0 0.0
    %659 = vmatpush1.msra.mxu0 0.0
    %660 = vmatprep.mubr.f32.mxu0 0.0
    %661 = vmatmul.mubr.f32.gmra.mrb[0].mxu0 %v594
    %v662 = vpop.f32.mrb[0].mxu0
    %v663 = vadd.f32 0.0, %v662
    %v664 = vpop.f32.mrb[0].mxu0
    %665 = vdwg.mxu0
    %v667 = vlaneseq
    %v668 = vshrl.u32 %v667, 7
    %v669 = vsub.s32 0, %v668
    %v670 = vrot.slane %v76, %v669
    %672 = vmatprep.subr.mxu0 0.0
    %673 = vmatpush1.msra.mxu0 %v44
    %674 = vmatprep.subr.mxu0 0.0
    %675 = vmatpush1.msra.mxu0 %v45
    %676 = vmatprep.subr.mxu0 0.0
    %677 = vmatpush1.msra.mxu0 %v46
    %678 = vmatprep.subr.mxu0 0.0
    %679 = vmatpush1.msra.mxu0 %v47
    %680 = vmatprep.subr.mxu0 0.0
    %681 = vmatpush1.msra.mxu0 %v48
    %682 = vmatprep.subr.mxu0 0.0
    %683 = vmatpush1.msra.mxu0 %v49
    %684 = vmatprep.subr.mxu0 0.0
    %685 = vmatpush1.msra.mxu0 %v50
    %686 = vmatprep.subr.mxu0 0.0
    %687 = vmatpush1.msra.mxu0 %v51
    %688 = vmatprep.subr.mxu0 0.0
    %689 = vmatpush1.msra.mxu0 %v52
    %690 = vmatprep.subr.mxu0 0.0
    %691 = vmatpush1.msra.mxu0 %v53
    %692 = vmatprep.subr.mxu0 0.0
    %693 = vmatpush1.msra.mxu0 %v54
    %694 = vmatprep.subr.mxu0 0.0
    %695 = vmatpush1.msra.mxu0 %v55
    %696 = vmatprep.subr.mxu0 0.0
    %697 = vmatpush1.msra.mxu0 %v56
    %698 = vmatprep.subr.mxu0 0.0
    %699 = vmatpush1.msra.mxu0 %v57
    %700 = vmatprep.subr.mxu0 0.0
    %701 = vmatpush1.msra.mxu0 %v58
    %702 = vmatprep.subr.mxu0 0.0
    %703 = vmatpush1.msra.mxu0 %v59
    %704 = vmatprep.subr.mxu0 0.0
    %705 = vmatpush1.msra.mxu0 %v60
    %706 = vmatprep.subr.mxu0 0.0
    %707 = vmatpush1.msra.mxu0 %v61
    %708 = vmatprep.subr.mxu0 0.0
    %709 = vmatpush1.msra.mxu0 %v62
    %710 = vmatprep.subr.mxu0 0.0
    %711 = vmatpush1.msra.mxu0 %v63
    %712 = vmatprep.subr.mxu0 0.0
    %713 = vmatpush1.msra.mxu0 %v64
    %714 = vmatprep.subr.mxu0 0.0
    %715 = vmatpush1.msra.mxu0 %v65
    %716 = vmatprep.subr.mxu0 0.0
    %717 = vmatpush1.msra.mxu0 %v66
    %718 = vmatprep.subr.mxu0 0.0
    %719 = vmatpush1.msra.mxu0 %v67
    %720 = vmatprep.subr.mxu0 0.0
    %721 = vmatpush1.msra.mxu0 %v68
    %722 = vmatprep.subr.mxu0 0.0
    %723 = vmatpush1.msra.mxu0 %v69
    %724 = vmatprep.subr.mxu0 0.0
    %725 = vmatpush1.msra.mxu0 %v70
    %726 = vmatprep.subr.mxu0 0.0
    %727 = vmatpush1.msra.mxu0 %v71
    %728 = vmatprep.subr.mxu0 0.0
    %729 = vmatpush1.msra.mxu0 %v72
    %730 = vmatprep.subr.mxu0 0.0
    %731 = vmatpush1.msra.mxu0 %v73
    %732 = vmatprep.subr.mxu0 0.0
    %733 = vmatpush1.msra.mxu0 %v74
    %734 = vmatprep.subr.mxu0 0.0
    %735 = vmatpush1.msra.mxu0 %v75
    %736 = vmatprep.mubr.f32.mxu0 %v663
    %737 = vmatmul.mubr.f32.gmra.mrb[0].mxu0 %v509
    %v738 = vpop.f32.mrb[0].mxu0
    %v739 = vadd.f32 %v670, %v738
    %v740 = vpop.f32.mrb[0].mxu0
    %741 = vdwg.mxu0
    %vm742 = vcmask 261120
    %743 = vst.msk [vmem:[#allocation2] sm:$0xff] %vm742, %v739
    %744 = vmatprep.subr.mxu0 0.0
    %745 = vmatpush1.xpose.msra.mxu0 %v276
    %746 = vmatprep.subr.mxu0 0.0
    %747 = vmatpush1.xpose.msra.mxu0 0.0
    %748 = vmatprep.subr.mxu0 0.0
    %749 = vmatpush1.xpose.msra.mxu0 0.0
    %750 = vmatprep.subr.mxu0 0.0
    %751 = vmatpush1.xpose.msra.mxu0 0.0
    %752 = vmatprep.subr.mxu0 0.0
    %753 = vmatpush1.xpose.msra.mxu0 0.0
    %754 = vmatprep.subr.mxu0 0.0
    %755 = vmatpush1.xpose.msra.mxu0 0.0
    %756 = vmatprep.subr.mxu0 0.0
    %757 = vmatpush1.xpose.msra.mxu0 0.0
    %758 = vmatprep.subr.mxu0 0.0
    %759 = vmatpush1.xpose.msra.mxu0 0.0
    %760 = vmatprep.subr.mxu0 0.0
    %761 = vmatpush1.xpose.msra.mxu0 0.0
    %762 = vmatprep.subr.mxu0 0.0
    %763 = vmatpush1.xpose.msra.mxu0 0.0
    %764 = vmatprep.subr.mxu0 0.0
    %765 = vmatpush1.xpose.msra.mxu0 0.0
    %766 = vmatprep.subr.mxu0 0.0
    %767 = vmatpush1.xpose.msra.mxu0 0.0
    %768 = vmatprep.subr.mxu0 0.0
    %769 = vmatpush1.xpose.msra.mxu0 0.0
    %770 = vmatprep.subr.mxu0 0.0
    %771 = vmatpush1.xpose.msra.mxu0 0.0
    %772 = vmatprep.subr.mxu0 0.0
    %773 = vmatpush1.xpose.msra.mxu0 0.0
    %774 = vmatprep.subr.mxu0 0.0
    %775 = vmatpush1.xpose.msra.mxu0 0.0
    %776 = vmatprep.subr.mxu0 0.0
    %777 = vmatpush1.xpose.msra.mxu0 0.0
    %778 = vmatprep.subr.mxu0 0.0
    %779 = vmatpush1.xpose.msra.mxu0 0.0
    %780 = vmatprep.subr.mxu0 0.0
    %781 = vmatpush1.xpose.msra.mxu0 0.0
    %782 = vmatprep.subr.mxu0 0.0
    %783 = vmatpush1.xpose.msra.mxu0 0.0
    %784 = vmatprep.subr.mxu0 0.0
    %785 = vmatpush1.xpose.msra.mxu0 0.0
    %786 = vmatprep.subr.mxu0 0.0
    %787 = vmatpush1.xpose.msra.mxu0 0.0
    %788 = vmatprep.subr.mxu0 0.0
    %789 = vmatpush1.xpose.msra.mxu0 0.0
    %790 = vmatprep.subr.mxu0 0.0
    %791 = vmatpush1.xpose.msra.mxu0 0.0
    %792 = vmatprep.subr.mxu0 0.0
    %793 = vmatpush1.xpose.msra.mxu0 0.0
    %794 = vmatprep.subr.mxu0 0.0
    %795 = vmatpush1.xpose.msra.mxu0 0.0
    %796 = vmatprep.subr.mxu0 0.0
    %797 = vmatpush1.xpose.msra.mxu0 0.0
    %798 = vmatprep.subr.mxu0 0.0
    %799 = vmatpush1.xpose.msra.mxu0 0.0
    %800 = vmatprep.subr.mxu0 0.0
    %801 = vmatpush1.xpose.msra.mxu0 0.0
    %802 = vmatprep.subr.mxu0 0.0
    %803 = vmatpush1.xpose.msra.mxu0 0.0
    %804 = vmatprep.subr.mxu0 0.0
    %805 = vmatpush1.xpose.msra.mxu0 0.0
    %806 = vmatprep.subr.mxu0 0.0
    %807 = vmatpush1.xpose.msra.mxu0 0.0
    %808 = vmatprep.mubr.f32.mxu0 0.0
    %809 = vmatmul.mubr.f32.gmra.mrb[0].mxu0 %v170
    %v810 = vpop.f32.mrb[0].mxu0
    %v811 = vadd.f32 0.0, %v810
    %v812 = vpop.f32.mrb[0].mxu0
    %813 = vdwg.mxu0
    %v814 = vsel %vm427, %v811, -inf
    %815 = vmax.xlane.f32.xlu0 %v814
    %v816 = vpop.xlane.xlu0 %815
    %v817 = vsub.f32 %v811, %v816
    %v818 = vmul.f32 %v817, 1.442695
    %v819 = vpow.pop %v818
    %v820 = vsel %vm427, %v819, 0.0
    %821 = vadd.xlane.f32.xlu0 %v820
    %v822 = vpop.xlane.xlu0 %821
    %v823 = vrcp.pop %v822
    %v824 = vmul.f32 %v819, %v823
    %v826 = vsel %vm427, %v824, 0
    %828 = vmatprep.subr.mxu0 0.0
    %829 = vmatpush1.msra.mxu0 %v353
    %830 = vmatprep.subr.mxu0 0.0
    %831 = vmatpush1.msra.mxu0 0.0
    %832 = vmatprep.subr.mxu0 0.0
    %833 = vmatpush1.msra.mxu0 0.0
    %834 = vmatprep.subr.mxu0 0.0
    %835 = vmatpush1.msra.mxu0 0.0
    %836 = vmatprep.subr.mxu0 0.0
    %837 = vmatpush1.msra.mxu0 0.0
    %838 = vmatprep.subr.mxu0 0.0
    %839 = vmatpush1.msra.mxu0 0.0
    %840 = vmatprep.subr.mxu0 0.0
    %841 = vmatpush1.msra.mxu0 0.0
    %842 = vmatprep.subr.mxu0 0.0
    %843 = vmatpush1.msra.mxu0 0.0
    %844 = vmatprep.subr.mxu0 0.0
    %845 = vmatpush1.msra.mxu0 0.0
    %846 = vmatprep.subr.mxu0 0.0
    %847 = vmatpush1.msra.mxu0 0.0
    %848 = vmatprep.subr.mxu0 0.0
    %849 = vmatpush1.msra.mxu0 0.0
    %850 = vmatprep.subr.mxu0 0.0
    %851 = vmatpush1.msra.mxu0 0.0
    %852 = vmatprep.subr.mxu0 0.0
    %853 = vmatpush1.msra.mxu0 0.0
    %854 = vmatprep.subr.mxu0 0.0
    %855 = vmatpush1.msra.mxu0 0.0
    %856 = vmatprep.subr.mxu0 0.0
    %857 = vmatpush1.msra.mxu0 0.0
    %858 = vmatprep.subr.mxu0 0.0
    %859 = vmatpush1.msra.mxu0 0.0
    %860 = vmatprep.subr.mxu0 0.0
    %861 = vmatpush1.msra.mxu0 0.0
    %862 = vmatprep.subr.mxu0 0.0
    %863 = vmatpush1.msra.mxu0 0.0
    %864 = vmatprep.subr.mxu0 0.0
    %865 = vmatpush1.msra.mxu0 0.0
    %866 = vmatprep.subr.mxu0 0.0
    %867 = vmatpush1.msra.mxu0 0.0
    %868 = vmatprep.subr.mxu0 0.0
    %869 = vmatpush1.msra.mxu0 0.0
    %870 = vmatprep.subr.mxu0 0.0
    %871 = vmatpush1.msra.mxu0 0.0
    %872 = vmatprep.subr.mxu0 0.0
    %873 = vmatpush1.msra.mxu0 0.0
    %874 = vmatprep.subr.mxu0 0.0
    %875 = vmatpush1.msra.mxu0 0.0
    %876 = vmatprep.subr.mxu0 0.0
    %877 = vmatpush1.msra.mxu0 0.0
    %878 = vmatprep.subr.mxu0 0.0
    %879 = vmatpush1.msra.mxu0 0.0
    %880 = vmatprep.subr.mxu0 0.0
    %881 = vmatpush1.msra.mxu0 0.0
    %882 = vmatprep.subr.mxu0 0.0
    %883 = vmatpush1.msra.mxu0 0.0
    %884 = vmatprep.subr.mxu0 0.0
    %885 = vmatpush1.msra.mxu0 0.0
    %886 = vmatprep.subr.mxu0 0.0
    %887 = vmatpush1.msra.mxu0 0.0
    %888 = vmatprep.subr.mxu0 0.0
    %889 = vmatpush1.msra.mxu0 0.0
    %890 = vmatprep.subr.mxu0 0.0
    %891 = vmatpush1.msra.mxu0 0.0
    %892 = vmatprep.mubr.f32.mxu0 0.0
    %893 = vmatmul.mubr.f32.gmra.mrb[0].mxu0 %v826
    %v894 = vpop.f32.mrb[0].mxu0
    %v895 = vadd.f32 0.0, %v894
    %v896 = vpop.f32.mrb[0].mxu0
    %897 = vdwg.mxu0
    %898 = vmatprep.subr.mxu0 0.0
    %899 = vmatpush1.xpose.msra.mxu0 %v278
    %900 = vmatprep.subr.mxu0 0.0
    %901 = vmatpush1.xpose.msra.mxu0 0.0
    %902 = vmatprep.subr.mxu0 0.0
    %903 = vmatpush1.xpose.msra.mxu0 0.0
    %904 = vmatprep.subr.mxu0 0.0
    %905 = vmatpush1.xpose.msra.mxu0 0.0
    %906 = vmatprep.subr.mxu0 0.0
    %907 = vmatpush1.xpose.msra.mxu0 0.0
    %908 = vmatprep.subr.mxu0 0.0
    %909 = vmatpush1.xpose.msra.mxu0 0.0
    %910 = vmatprep.subr.mxu0 0.0
    %911 = vmatpush1.xpose.msra.mxu0 0.0
    %912 = vmatprep.subr.mxu0 0.0
    %913 = vmatpush1.xpose.msra.mxu0 0.0
    %914 = vmatprep.subr.mxu0 0.0
    %915 = vmatpush1.xpose.msra.mxu0 0.0
    %916 = vmatprep.subr.mxu0 0.0
    %917 = vmatpush1.xpose.msra.mxu0 0.0
    %918 = vmatprep.subr.mxu0 0.0
    %919 = vmatpush1.xpose.msra.mxu0 0.0
    %920 = vmatprep.subr.mxu0 0.0
    %921 = vmatpush1.xpose.msra.mxu0 0.0
    %922 = vmatprep.subr.mxu0 0.0
    %923 = vmatpush1.xpose.msra.mxu0 0.0
    %924 = vmatprep.subr.mxu0 0.0
    %925 = vmatpush1.xpose.msra.mxu0 0.0
    %926 = vmatprep.subr.mxu0 0.0
    %927 = vmatpush1.xpose.msra.mxu0 0.0
    %928 = vmatprep.subr.mxu0 0.0
    %929 = vmatpush1.xpose.msra.mxu0 0.0
    %930 = vmatprep.subr.mxu0 0.0
    %931 = vmatpush1.xpose.msra.mxu0 0.0
    %932 = vmatprep.subr.mxu0 0.0
    %933 = vmatpush1.xpose.msra.mxu0 0.0
    %934 = vmatprep.subr.mxu0 0.0
    %935 = vmatpush1.xpose.msra.mxu0 0.0
    %936 = vmatprep.subr.mxu0 0.0
    %937 = vmatpush1.xpose.msra.mxu0 0.0
    %938 = vmatprep.subr.mxu0 0.0
    %939 = vmatpush1.xpose.msra.mxu0 0.0
    %940 = vmatprep.subr.mxu0 0.0
    %941 = vmatpush1.xpose.msra.mxu0 0.0
    %942 = vmatprep.subr.mxu0 0.0
    %943 = vmatpush1.xpose.msra.mxu0 0.0
    %944 = vmatprep.subr.mxu0 0.0
    %945 = vmatpush1.xpose.msra.mxu0 0.0
    %946 = vmatprep.subr.mxu0 0.0
    %947 = vmatpush1.xpose.msra.mxu0 0.0
    %948 = vmatprep.subr.mxu0 0.0
    %949 = vmatpush1.xpose.msra.mxu0 0.0
    %950 = vmatprep.subr.mxu0 0.0
    %951 = vmatpush1.xpose.msra.mxu0 0.0
    %952 = vmatprep.subr.mxu0 0.0
    %953 = vmatpush1.xpose.msra.mxu0 0.0
    %954 = vmatprep.subr.mxu0 0.0
    %955 = vmatpush1.xpose.msra.mxu0 0.0
    %956 = vmatprep.subr.mxu0 0.0
    %957 = vmatpush1.xpose.msra.mxu0 0.0
    %958 = vmatprep.subr.mxu0 0.0
    %959 = vmatpush1.xpose.msra.mxu0 0.0
    %960 = vmatprep.subr.mxu0 0.0
    %961 = vmatpush1.xpose.msra.mxu0 0.0
    %962 = vmatprep.mubr.f32.mxu0 0.0
    %963 = vmatmul.mubr.f32.gmra.mrb[0].mxu0 %v172
    %v964 = vpop.f32.mrb[0].mxu0
    %v965 = vadd.f32 0.0, %v964
    %v966 = vpop.f32.mrb[0].mxu0
    %967 = vdwg.mxu0
    %v968 = vsel %vm427, %v965, -inf
    %969 = vmax.xlane.f32.xlu0 %v968
    %v970 = vpop.xlane.xlu0 %969
    %v971 = vsub.f32 %v965, %v970
    %v972 = vmul.f32 %v971, 1.442695
    %v973 = vpow.pop %v972
    %v974 = vsel %vm427, %v973, 0.0
    %975 = vadd.xlane.f32.xlu0 %v974
    %v976 = vpop.xlane.xlu0 %975
    %v977 = vrcp.pop %v976
    %v978 = vmul.f32 %v973, %v977
    %v980 = vsel %vm427, %v978, 0
    %982 = vmatprep.subr.mxu0 0.0
    %983 = vmatpush1.msra.mxu0 %v355
    %984 = vmatprep.subr.mxu0 0.0
    %985 = vmatpush1.msra.mxu0 0.0
    %986 = vmatprep.subr.mxu0 0.0
    %987 = vmatpush1.msra.mxu0 0.0
    %988 = vmatprep.subr.mxu0 0.0
    %989 = vmatpush1.msra.mxu0 0.0
    %990 = vmatprep.subr.mxu0 0.0
    %991 = vmatpush1.msra.mxu0 0.0
    %992 = vmatprep.subr.mxu0 0.0
    %993 = vmatpush1.msra.mxu0 0.0
    %994 = vmatprep.subr.mxu0 0.0
    %995 = vmatpush1.msra.mxu0 0.0
    %996 = vmatprep.subr.mxu0 0.0
    %997 = vmatpush1.msra.mxu0 0.0
    %998 = vmatprep.subr.mxu0 0.0
    %999 = vmatpush1.msra.mxu0 0.0
    %1000 = vmatprep.subr.mxu0 0.0
    %1001 = vmatpush1.msra.mxu0 0.0
    %1002 = vmatprep.subr.mxu0 0.0
    %1003 = vmatpush1.msra.mxu0 0.0
    %1004 = vmatprep.subr.mxu0 0.0
    %1005 = vmatpush1.msra.mxu0 0.0
    %1006 = vmatprep.subr.mxu0 0.0
    %1007 = vmatpush1.msra.mxu0 0.0
    %1008 = vmatprep.subr.mxu0 0.0
    %1009 = vmatpush1.msra.mxu0 0.0
    %1010 = vmatprep.subr.mxu0 0.0
    %1011 = vmatpush1.msra.mxu0 0.0
    %1012 = vmatprep.subr.mxu0 0.0
    %1013 = vmatpush1.msra.mxu0 0.0
    %1014 = vmatprep.subr.mxu0 0.0
    %1015 = vmatpush1.msra.mxu0 0.0
    %1016 = vmatprep.subr.mxu0 0.0
    %1017 = vmatpush1.msra.mxu0 0.0
    %1018 = vmatprep.subr.mxu0 0.0
    %1019 = vmatpush1.msra.mxu0 0.0
    %1020 = vmatprep.subr.mxu0 0.0
    %1021 = vmatpush1.msra.mxu0 0.0
    %1022 = vmatprep.subr.mxu0 0.0
    %1023 = vmatpush1.msra.mxu0 0.0
    %1024 = vmatprep.subr.mxu0 0.0
    %1025 = vmatpush1.msra.mxu0 0.0
    %1026 = vmatprep.subr.mxu0 0.0
    %1027 = vmatpush1.msra.mxu0 0.0
    %1028 = vmatprep.subr.mxu0 0.0
    %1029 = vmatpush1.msra.mxu0 0.0
    %1030 = vmatprep.subr.mxu0 0.0
    %1031 = vmatpush1.msra.mxu0 0.0
    %1032 = vmatprep.subr.mxu0 0.0
    %1033 = vmatpush1.msra.mxu0 0.0
    %1034 = vmatprep.subr.mxu0 0.0
    %1035 = vmatpush1.msra.mxu0 0.0
    %1036 = vmatprep.subr.mxu0 0.0
    %1037 = vmatpush1.msra.mxu0 0.0
    %1038 = vmatprep.subr.mxu0 0.0
    %1039 = vmatpush1.msra.mxu0 0.0
    %1040 = vmatprep.subr.mxu0 0.0
    %1041 = vmatpush1.msra.mxu0 0.0
    %1042 = vmatprep.subr.mxu0 0.0
    %1043 = vmatpush1.msra.mxu0 0.0
    %1044 = vmatprep.subr.mxu0 0.0
    %1045 = vmatpush1.msra.mxu0 0.0
    %1046 = vmatprep.mubr.f32.mxu0 0.0
    %1047 = vmatmul.mubr.f32.gmra.mrb[0].mxu0 %v980
    %v1048 = vpop.f32.mrb[0].mxu0
    %v1049 = vadd.f32 0.0, %v1048
    %v1050 = vpop.f32.mrb[0].mxu0
    %1051 = vdwg.mxu0
    %1052 = vmatprep.subr.mxu0 0.0
    %1053 = vmatpush1.msra.mxu0 %v44
    %1054 = vmatprep.subr.mxu0 0.0
    %1055 = vmatpush1.msra.mxu0 %v45
    %1056 = vmatprep.subr.mxu0 0.0
    %1057 = vmatpush1.msra.mxu0 %v46
    %1058 = vmatprep.subr.mxu0 0.0
    %1059 = vmatpush1.msra.mxu0 %v47
    %1060 = vmatprep.subr.mxu0 0.0
    %1061 = vmatpush1.msra.mxu0 %v48
    %1062 = vmatprep.subr.mxu0 0.0
    %1063 = vmatpush1.msra.mxu0 %v49
    %1064 = vmatprep.subr.mxu0 0.0
    %1065 = vmatpush1.msra.mxu0 %v50
    %1066 = vmatprep.subr.mxu0 0.0
    %1067 = vmatpush1.msra.mxu0 %v51
    %1068 = vmatprep.subr.mxu0 0.0
    %1069 = vmatpush1.msra.mxu0 %v52
    %1070 = vmatprep.subr.mxu0 0.0
    %1071 = vmatpush1.msra.mxu0 %v53
    %1072 = vmatprep.subr.mxu0 0.0
    %1073 = vmatpush1.msra.mxu0 %v54
    %1074 = vmatprep.subr.mxu0 0.0
    %1075 = vmatpush1.msra.mxu0 %v55
    %1076 = vmatprep.subr.mxu0 0.0
    %1077 = vmatpush1.msra.mxu0 %v56
    %1078 = vmatprep.subr.mxu0 0.0
    %1079 = vmatpush1.msra.mxu0 %v57
    %1080 = vmatprep.subr.mxu0 0.0
    %1081 = vmatpush1.msra.mxu0 %v58
    %1082 = vmatprep.subr.mxu0 0.0
    %1083 = vmatpush1.msra.mxu0 %v59
    %1084 = vmatprep.subr.mxu0 0.0
    %1085 = vmatpush1.msra.mxu0 %v60
    %1086 = vmatprep.subr.mxu0 0.0
    %1087 = vmatpush1.msra.mxu0 %v61
    %1088 = vmatprep.subr.mxu0 0.0
    %1089 = vmatpush1.msra.mxu0 %v62
    %1090 = vmatprep.subr.mxu0 0.0
    %1091 = vmatpush1.msra.mxu0 %v63
    %1092 = vmatprep.subr.mxu0 0.0
    %1093 = vmatpush1.msra.mxu0 %v64
    %1094 = vmatprep.subr.mxu0 0.0
    %1095 = vmatpush1.msra.mxu0 %v65
    %1096 = vmatprep.subr.mxu0 0.0
    %1097 = vmatpush1.msra.mxu0 %v66
    %1098 = vmatprep.subr.mxu0 0.0
    %1099 = vmatpush1.msra.mxu0 %v67
    %1100 = vmatprep.subr.mxu0 0.0
    %1101 = vmatpush1.msra.mxu0 %v68
    %1102 = vmatprep.subr.mxu0 0.0
    %1103 = vmatpush1.msra.mxu0 %v69
    %1104 = vmatprep.subr.mxu0 0.0
    %1105 = vmatpush1.msra.mxu0 %v70
    %1106 = vmatprep.subr.mxu0 0.0
    %1107 = vmatpush1.msra.mxu0 %v71
    %1108 = vmatprep.subr.mxu0 0.0
    %1109 = vmatpush1.msra.mxu0 %v72
    %1110 = vmatprep.subr.mxu0 0.0
    %1111 = vmatpush1.msra.mxu0 %v73
    %1112 = vmatprep.subr.mxu0 0.0
    %1113 = vmatpush1.msra.mxu0 %v74
    %1114 = vmatprep.subr.mxu0 0.0
    %1115 = vmatpush1.msra.mxu0 %v75
    %1116 = vmatprep.mubr.f32.mxu0 %v1049
    %1117 = vmatmul.mubr.f32.gmra.mrb[0].mxu0 %v895
    %v1118 = vpop.f32.mrb[0].mxu0
    %v1119 = vadd.f32 %v670, %v1118
    %v1120 = vpop.f32.mrb[0].mxu0
    %1121 = vdwg.mxu0
    %s1122 = scalar_lea.vmem [#allocation2], 8
    %1123 = vst.msk [vmem:[%s1122] sm:$0xff] %vm742, %v1119
    // Predicated region
    $region34: #{tpu_custom_call.1} parent=1 // pred_check
      _
    $region35: #{tpu_custom_call.1} parent=1 // pred_check_branch
      %1125 = sbr.rel (0) target = $region37
    $region36: #{tpu_custom_call.1} parent=1 // pred_region
      %s1127 = ssub.s32 256, 256
      %1128 = vsyncadd [#allocation3], %s1127
      %s1129 = sshll.u32 [#allocation2], 4
      %s1130 = int_to_ptr.vmem [resolvable:$true] %s1129
      %1135 = dma.vmem_to_hbm [thread:$0]  %s1130, 256, %s8, [#allocation3], 128, 128, 8
    $region37: #{tpu_custom_call.1} parent=1 // pred_fallthru
      _
    // Predicated region
    $region38: #{tpu_custom_call.1} parent=1 // pred_check
      _
    $region39: #{tpu_custom_call.1} parent=1 // pred_check_branch
      %1137 = sbr.rel (0) target = $region41
    $region40: #{tpu_custom_call.1} parent=1 // pred_region
      %1138 = dma.done [#allocation3], 256
    $region41: #{tpu_custom_call.1} parent=1 // pred_fallthru
      _
    %1139 = vsyncpa [#allocation3], 1

</llo_original>
